<compile_context>
chip_gen: v7x
topology: tpu7x:2x2x1
jax: 0.10.0
libtpu: 0.0.40
codegen_flags: <defaults>
</compile_context>

<pallas_src>
import functools

import jax
import jax.numpy as jnp
from jax.experimental import pallas as pl
from jax.experimental.pallas import tpu as pltpu


def _mlp_kernel(x_ref, w1_ref, b1_ref, w2_ref, b2_ref, o_ref):
    # x_ref : (2, Bt)  float32  feature-major input tile (batch in lanes)
    # w1_ref: (H, 2)   float32  fc1.weight, native PyTorch layout
    # b1_ref: (H, 1)   float32  fc1.bias as a column
    # b2_ref: (1, 1)   float32  fc2.bias scalar (SMEM)
    # w2_ref: (H, 1)   float32  fc2.weight as a column
    # o_ref : (1, Bt)  float32  output tile (lane-dense)
    x0 = x_ref[0:1, :]            # (1, Bt)
    x1 = x_ref[1:2, :]            # (1, Bt)
    w1c0 = w1_ref[:, 0:1]         # (H, 1)
    w1c1 = w1_ref[:, 1:2]         # (H, 1)

    # fc1 + tanh on VPU/EUP: broadcast (H,1) x (1,Bt) -> (H,Bt); no MXU.
    h = jnp.tanh(w1c0 * x0 + w1c1 * x1 + b1_ref[...])

    # fc2 as multiply + sublane reduction (VPU + XLU); scalar bias from SMEM.
    z = jnp.sum(w2_ref[...] * h, axis=0, keepdims=True) + b2_ref[0, 0]
    o_ref[...] = z.astype(o_ref.dtype)


def _round_up(a, m):
    return ((a + m - 1) // m) * m


@functools.partial(jax.jit, static_argnames=("block_b",))
def pde_solver_forward(x, w1, b1, w2, b2, *, block_b=1024):
    """
    x  : (B, 2)  float32
    w1 : (H, 2)  float32  (PyTorch fc1.weight: out_features x in_features)
    b1 : (H,)    float32
    w2 : (1, H)  float32  (PyTorch fc2.weight)
    b2 : (1,)    float32
    returns z : (B, 1) float32
    """
    B = x.shape[0]
    H = w1.shape[0]

    # Lane-dense, feature-major layout plumbing (no weight transposes needed).
    x_fm = x.T                     # (2, B)
    b1_c = b1.reshape(H, 1)        # (H, 1)
    w2_c = w2.reshape(H, 1)        # (H, 1) : (1,H) -> (H,1) is a pure reshape
    b2_s = b2.reshape(1, 1)        # (1, 1) -> SMEM

    # Batch tile: multiple of 128 lanes, as large as sensible. VMEM budget is
    # tiny: (2 + H + 1) * Bt * 4 B per buffer; even Bt=8192 with H=32 < 1.2 MiB,
    # comfortably inside v7x's 64 MiB physical VMEM.
    bt = min(block_b, _round_up(B, 128))
    b_pad = _round_up(B, bt)
    if b_pad != B:
        x_fm = jnp.pad(x_fm, ((0, 0), (0, b_pad - B)))

    grid = (b_pad // bt,)
    vmem = pltpu.MemorySpace.VMEM
    smem = pltpu.MemorySpace.SMEM

    cost = pl.CostEstimate(
        flops=6 * b_pad * H,              # 2 FMA (fc1) + mul/add + reduce (fc2)
        transcendentals=b_pad * H,        # tanh
        bytes_accessed=4 * (3 * b_pad + 4 * H + 1),
    )

    out = pl.pallas_call(
        _mlp_kernel,
        out_shape=jax.ShapeDtypeStruct((1, b_pad), jnp.float32),
        grid=grid,
        in_specs=[
            pl.BlockSpec((2, bt), lambda i: (0, i), memory_space=vmem),   # x tile
            pl.BlockSpec((H, 2), lambda i: (0, 0), memory_space=vmem),    # w1 resident
            pl.BlockSpec((H, 1), lambda i: (0, 0), memory_space=vmem),    # b1 resident
            pl.BlockSpec((H, 1), lambda i: (0, 0), memory_space=vmem),    # w2 resident
            pl.BlockSpec(memory_space=smem),                              # b2 scalar
        ],
        out_specs=pl.BlockSpec((1, bt), lambda i: (0, i), memory_space=vmem),
        compiler_params=pltpu.CompilerParams(
            dimension_semantics=("parallel",),   # megacore sharding on v7x
        ),
        cost_estimate=cost,
    )(x_fm, w1, b1_c, w2_c, b2_s)

    return out[0, :B].reshape(B, 1)


def _init_linear_params(key, in_features, out_features):
    """Deterministic init mimicking torch.nn.Linear default U[-1/sqrt(in), 1/sqrt(in)]."""
    kw, kb = jax.random.split(key)
    bound = 1.0 / jnp.sqrt(jnp.float32(in_features))
    w = jax.random.uniform(
        kw, (out_features, in_features), jnp.float32, minval=-bound, maxval=bound
    )
    b = jax.random.uniform(
        kb, (out_features,), jnp.float32, minval=-bound, maxval=bound
    )
    return w, b


if __name__ == "__main__":
    key = jax.random.PRNGKey(0)
    k_x, k_fc1, k_fc2, k_x2 = jax.random.split(key, 4)

    batch = 8
    num_hidden = 32

    # (batchSize, 2) collocation points, e.g. (x, y) in [0, 1]^2
    x = jax.random.uniform(k_x, (batch, 2), jnp.float32)
    w1, b1 = _init_linear_params(k_fc1, 2, num_hidden)   # fc1: Linear(2 -> H)
    w2, b2 = _init_linear_params(k_fc2, num_hidden, 1)   # fc2: Linear(H -> 1)

    z = jax.block_until_ready(pde_solver_forward(x, w1, b1, w2, b2))

    z_ref = jnp.tanh(x @ w1.T + b1) @ w2.T + b2
    assert z.shape == (batch, 1)
    assert jnp.allclose(z, z_ref, atol=1e-5, rtol=1e-5)

    # Second check: non-multiple-of-128 batch exercising padding + multi-step grid.
    batch2 = 257
    x2 = jax.random.uniform(k_x2, (batch2, 2), jnp.float32)
    z2 = jax.block_until_ready(pde_solver_forward(x2, w1, b1, w2, b2, block_b=128))
    z2_ref = jnp.tanh(x2 @ w1.T + b1) @ w2.T + b2
    assert z2.shape == (batch2, 1)
    assert jnp.allclose(z2, z2_ref, atol=1e-5, rtol=1e-5)

    print("KERNEL_OK")
</pallas_src>

<mosaic_0001>
module attributes {stable_mosaic.version = 11 : i64} {
  func.func @_mlp_kernel(%arg0: i32, %arg1: memref<2x128xf32, #tpu.memory_space<vmem>>, %arg2: memref<32x2xf32, #tpu.memory_space<vmem>>, %arg3: memref<32x1xf32, #tpu.memory_space<vmem>>, %arg4: memref<32x1xf32, #tpu.memory_space<vmem>>, %arg5: memref<1x1xf32, #tpu.memory_space<smem>>, %arg6: memref<1x128xf32, #tpu.memory_space<vmem>>) attributes {dimension_semantics = [#tpu.dimension_semantics<parallel>], iteration_bounds = array<i64: 1>, scalar_prefetch = 0 : i64, scratch_operands = 0 : i64, tpu.core_type = #tpu.core_type<tc>, window_params = [{transform_indices = @transform_0, window_bounds = array<i64: 2, 128>}, {pipeline_mode = #tpu.pipeline_mode<synchronous>, transform_indices = @transform_1, window_bounds = array<i64: 32, 2>}, {pipeline_mode = #tpu.pipeline_mode<synchronous>, transform_indices = @transform_2, window_bounds = array<i64: 32, 1>}, {pipeline_mode = #tpu.pipeline_mode<synchronous>, transform_indices = @transform_3, window_bounds = array<i64: 32, 1>}, {transform_indices = @transform_4, window_bounds = array<i64: 1, 1>}, {transform_indices = @transform_5, window_bounds = array<i64: 1, 128>}]} {
    %c0 = arith.constant 0 : index
    %c0_0 = arith.constant 0 : index
    %0 = vector.load %arg1[%c0, %c0_0] : memref<2x128xf32, #tpu.memory_space<vmem>>, vector<1x128xf32>
    %c1 = arith.constant 1 : index
    %c0_1 = arith.constant 0 : index
    %1 = vector.load %arg1[%c1, %c0_1] : memref<2x128xf32, #tpu.memory_space<vmem>>, vector<1x128xf32>
    %c0_2 = arith.constant 0 : index
    %c0_3 = arith.constant 0 : index
    %2 = vector.load %arg2[%c0_2, %c0_3] : memref<32x2xf32, #tpu.memory_space<vmem>>, vector<32x1xf32>
    %c0_4 = arith.constant 0 : index
    %c1_5 = arith.constant 1 : index
    %3 = vector.load %arg2[%c0_4, %c1_5] : memref<32x2xf32, #tpu.memory_space<vmem>>, vector<32x1xf32>
    %4 = vector.broadcast %2 : vector<32x1xf32> to vector<32x128xf32>
    %5 = vector.broadcast %0 : vector<1x128xf32> to vector<32x128xf32>
    %6 = arith.mulf %4, %5 : vector<32x128xf32>
    %7 = vector.broadcast %3 : vector<32x1xf32> to vector<32x128xf32>
    %8 = vector.broadcast %1 : vector<1x128xf32> to vector<32x128xf32>
    %9 = arith.mulf %7, %8 : vector<32x128xf32>
    %10 = arith.addf %6, %9 : vector<32x128xf32>
    %c0_6 = arith.constant 0 : index
    %c0_7 = arith.constant 0 : index
    %11 = vector.load %arg3[%c0_6, %c0_7] : memref<32x1xf32, #tpu.memory_space<vmem>>, vector<32x1xf32>
    %12 = vector.broadcast %11 : vector<32x1xf32> to vector<32x128xf32>
    %13 = arith.addf %10, %12 : vector<32x128xf32>
    %14 = math.tanh %13 : vector<32x128xf32>
    %c0_8 = arith.constant 0 : index
    %c0_9 = arith.constant 0 : index
    %15 = vector.load %arg4[%c0_8, %c0_9] : memref<32x1xf32, #tpu.memory_space<vmem>>, vector<32x1xf32>
    %16 = vector.broadcast %15 : vector<32x1xf32> to vector<32x128xf32>
    %17 = arith.mulf %16, %14 : vector<32x128xf32>
    %cst = arith.constant dense<0.000000e+00> : vector<128xf32>
    %18 = vector.multi_reduction <add>, %17, %cst [0] : vector<32x128xf32> to vector<128xf32>
    %19 = vector.shape_cast %18 : vector<128xf32> to vector<1x128xf32>
    %c0_10 = arith.constant 0 : index
    %c0_11 = arith.constant 0 : index
    %20 = memref.load %arg5[%c0_10, %c0_11] : memref<1x1xf32, #tpu.memory_space<smem>>
    %21 = vector.broadcast %20 : f32 to vector<1x128xf32>
    %22 = arith.addf %19, %21 : vector<1x128xf32>
    %c0_12 = arith.constant 0 : index
    %c0_13 = arith.constant 0 : index
    %23 = vector.load %arg6[%c0_12, %c0_13] : memref<1x128xf32, #tpu.memory_space<vmem>>, vector<1x128xf32>
    tpu.vector_store %arg6[%c0_12, %c0_13], %22 {strides = array<i32>} : memref<1x128xf32, #tpu.memory_space<vmem>>, vector<1x128xf32>,
    return
  }
  func.func @transform_0(%arg0: i32) -> (i32, i32) {
    %c0_i32 = arith.constant 0 : i32
    %c0_i32_0 = arith.constant 0 : i32
    return %c0_i32, %arg0 : i32, i32
  }
  func.func @transform_1(%arg0: i32) -> (i32, i32) {
    %c0_i32 = arith.constant 0 : i32
    %c0_i32_0 = arith.constant 0 : i32
    %c0_i32_1 = arith.constant 0 : i32
    return %c0_i32, %c0_i32_0 : i32, i32
  }
  func.func @transform_2(%arg0: i32) -> (i32, i32) {
    %c0_i32 = arith.constant 0 : i32
    %c0_i32_0 = arith.constant 0 : i32
    %c0_i32_1 = arith.constant 0 : i32
    return %c0_i32, %c0_i32_0 : i32, i32
  }
  func.func @transform_3(%arg0: i32) -> (i32, i32) {
    %c0_i32 = arith.constant 0 : i32
    %c0_i32_0 = arith.constant 0 : i32
    %c0_i32_1 = arith.constant 0 : i32
    return %c0_i32, %c0_i32_0 : i32, i32
  }
  func.func @transform_4(%arg0: i32) -> (i32, i32) {
    %c0_i32 = arith.constant 0 : i32
    %c0_i32_0 = arith.constant 0 : i32
    %c0_i32_1 = arith.constant 0 : i32
    return %c0_i32, %c0_i32_0 : i32, i32
  }
  func.func @transform_5(%arg0: i32) -> (i32, i32) {
    %c0_i32 = arith.constant 0 : i32
    %c0_i32_0 = arith.constant 0 : i32
    return %c0_i32, %arg0 : i32, i32
  }
}

</mosaic_0001>

<llo_original>
// kernel: pde_solver_forward.1
$region0: #{pde_solver_forward.1}
  #allocation0 [shape = 'u32[]', space=smem, size = 0x4, offset = 0x4, fixed_abs, tag = 'smem constant byte address 0x4 - core index']
  #allocation1 [shape = 'u32[144,128]{1,0:T(1,128)}', space=vmem, size = 0x12000, scoped, tag = 'internal scratch']
  #allocation2 [shape = 'f32[1,1]{1,0:T(1,128)S(6)}', space=smem, size = 0x200, scoped, tag = 'scoped memory for pde_solver_forward.1']
  %s0 = inlined_call_operand.vmem [shape: f32[2,128], index: 0, kind: input, shape index: {}]
  %s1 = inlined_call_operand.vmem [shape: f32[32,2], index: 1, kind: input, shape index: {}]
  %s2 = inlined_call_operand.vmem [shape: f32[32,1], index: 2, kind: input, shape index: {}]
  %s3 = inlined_call_operand.vmem [shape: f32[32,1], index: 3, kind: input, shape index: {}]
  %s4 = inlined_call_operand.<no memory space> [shape: f32[1,1], index: 4, kind: input, shape index: {}]
  %s5 = inlined_call_operand.vmem [shape: f32[1,128], index: 5, kind: output, shape index: {}]
  %s6 = sld [smem:[#allocation0]]
  $region30: #{pde_solver_forward.1} parent=0
    _
  %s8 = ssub.s32 1, %s6
  %s9 = scalar_select 0, %s8, %s6
  %10 = sst [smem:[#allocation2]] %s4
  // Predicated region
  $region2: #{pde_solver_forward.1} parent=0 // pred_check
    _
  $region3: #{pde_solver_forward.1} parent=0 // pred_check_branch
    %12 = sbr.rel (0) target = $region5
  $region4: #{pde_solver_forward.1} parent=0 // pred_region
    _
  $region5: #{pde_solver_forward.1} parent=0 // pred_fallthru
    _
  // Predicated region
  $region6: #{pde_solver_forward.1} parent=0 // pred_check
    _
  $region7: #{pde_solver_forward.1} parent=0 // pred_check_branch
    %14 = sbr.rel (0) target = $region9
  $region8: #{pde_solver_forward.1} parent=0 // pred_region
    _
  $region9: #{pde_solver_forward.1} parent=0 // pred_fallthru
    _
  // Predicated region
  $region10: #{pde_solver_forward.1} parent=0 // pred_check
    _
  $region11: #{pde_solver_forward.1} parent=0 // pred_check_branch
    %16 = sbr.rel (0) target = $region13
  $region12: #{pde_solver_forward.1} parent=0 // pred_region
    _
  $region13: #{pde_solver_forward.1} parent=0 // pred_fallthru
    _
  // Predicated region
  $region14: #{pde_solver_forward.1} parent=0 // pred_check
    _
  $region15: #{pde_solver_forward.1} parent=0 // pred_check_branch
    %18 = sbr.rel (0) target = $region17
  $region16: #{pde_solver_forward.1} parent=0 // pred_region
    _
  $region17: #{pde_solver_forward.1} parent=0 // pred_fallthru
    _
  // Predicated region
  $region18: #{pde_solver_forward.1} parent=0 // pred_check
    _
  $region19: #{pde_solver_forward.1} parent=0 // pred_check_branch
    %20 = sbr.rel (0) target = $region21
  $region20: #{pde_solver_forward.1} parent=0 // pred_region
    _
  $region21: #{pde_solver_forward.1} parent=0 // pred_fallthru
    _
  %v21 = vld [vmem:[%s0] sm:$0x1]
  %v22 = vld [vmem:[%s0 + $0x1] sm:$0x1]
  %v23 = vld [vmem:[%s1] sm:$0xff]
  %v24 = vld [vmem:[%s1 + $0x8] sm:$0xff]
  %v25 = vld [vmem:[%s1 + $0x10] sm:$0xff]
  %v26 = vld [vmem:[%s1 + $0x18] sm:$0xff]
  %28 = vset.pattern.permute.xlu0 0
  %29 = vperm.xlu0 %28, %v23
  %v30 = vpop.permute.xlu0 %29
  %33 = vset.pattern.permute.xlu0 0
  %34 = vperm.xlu0 %33, %v24
  %v35 = vpop.permute.xlu0 %34
  %38 = vset.pattern.permute.xlu0 0
  %39 = vperm.xlu0 %38, %v25
  %v40 = vpop.permute.xlu0 %39
  %43 = vset.pattern.permute.xlu0 0
  %44 = vperm.xlu0 %43, %v26
  %v45 = vpop.permute.xlu0 %44
  %v47 = vlaneseq
  %v48 = vshrl.u32 %v47, 7
  %v49 = vsub.s32 0, %v48
  %v50 = vrot.slane %v21, %v49
  %v51 = vmul.f32 %v30, %v50
  %v52 = vmul.f32 %v35, %v50
  %v53 = vmul.f32 %v40, %v50
  %v54 = vmul.f32 %v45, %v50
  %55 = vset.pattern.permute.xlu0 1
  %56 = vperm.xlu0 %55, %v23
  %v57 = vpop.permute.xlu0 %56
  %59 = vset.pattern.permute.xlu0 1
  %60 = vperm.xlu0 %59, %v24
  %v61 = vpop.permute.xlu0 %60
  %63 = vset.pattern.permute.xlu0 1
  %64 = vperm.xlu0 %63, %v25
  %v65 = vpop.permute.xlu0 %64
  %67 = vset.pattern.permute.xlu0 1
  %68 = vperm.xlu0 %67, %v26
  %v69 = vpop.permute.xlu0 %68
  %v71 = vlaneseq
  %v72 = vshrl.u32 %v71, 7
  %v73 = vsub.s32 0, %v72
  %v74 = vrot.slane %v22, %v73
  %v75 = vmul.f32 %v57, %v74
  %v76 = vmul.f32 %v61, %v74
  %v77 = vmul.f32 %v65, %v74
  %v78 = vmul.f32 %v69, %v74
  %v79 = vadd.f32 %v51, %v75
  %v80 = vadd.f32 %v52, %v76
  %v81 = vadd.f32 %v53, %v77
  %v82 = vadd.f32 %v54, %v78
  %v83 = vld [vmem:[%s2] sm:$0xff]
  %v84 = vld [vmem:[%s2 + $0x8] sm:$0xff]
  %v85 = vld [vmem:[%s2 + $0x10] sm:$0xff]
  %v86 = vld [vmem:[%s2 + $0x18] sm:$0xff]
  %88 = vset.pattern.permute.xlu0 0
  %89 = vperm.xlu0 %88, %v83
  %v90 = vpop.permute.xlu0 %89
  %93 = vset.pattern.permute.xlu0 0
  %94 = vperm.xlu0 %93, %v84
  %v95 = vpop.permute.xlu0 %94
  %98 = vset.pattern.permute.xlu0 0
  %99 = vperm.xlu0 %98, %v85
  %v100 = vpop.permute.xlu0 %99
  %103 = vset.pattern.permute.xlu0 0
  %104 = vperm.xlu0 %103, %v86
  %v105 = vpop.permute.xlu0 %104
  %v107 = vadd.f32 %v79, %v90
  %v108 = vadd.f32 %v80, %v95
  %v109 = vadd.f32 %v81, %v100
  %v110 = vadd.f32 %v82, %v105
  %v111 = vtanh.pop %v107
  %v112 = vtanh.pop %v108
  %v113 = vtanh.pop %v109
  %v114 = vtanh.pop %v110
  %v115 = vld [vmem:[%s3] sm:$0xff]
  %v116 = vld [vmem:[%s3 + $0x8] sm:$0xff]
  %v117 = vld [vmem:[%s3 + $0x10] sm:$0xff]
  %v118 = vld [vmem:[%s3 + $0x18] sm:$0xff]
  %120 = vset.pattern.permute.xlu0 0
  %121 = vperm.xlu0 %120, %v115
  %v122 = vpop.permute.xlu0 %121
  %125 = vset.pattern.permute.xlu0 0
  %126 = vperm.xlu0 %125, %v116
  %v127 = vpop.permute.xlu0 %126
  %130 = vset.pattern.permute.xlu0 0
  %131 = vperm.xlu0 %130, %v117
  %v132 = vpop.permute.xlu0 %131
  %135 = vset.pattern.permute.xlu0 0
  %136 = vperm.xlu0 %135, %v118
  %v137 = vpop.permute.xlu0 %136
  %v139 = vmul.f32 %v122, %v111
  %v140 = vmul.f32 %v127, %v112
  %v141 = vmul.f32 %v132, %v113
  %v142 = vmul.f32 %v137, %v114
  %v143 = vadd.f32 %v139, %v140
  %v144 = vadd.f32 %v143, %v141
  %v145 = vadd.f32 %v144, %v142
  %v146 = vrot.slane %v145, 4
  %v147 = vadd.f32 %v145, %v146
  %v148 = vrot.slane %v147, 2
  %v149 = vadd.f32 %v147, %v148
  %v150 = vrot.slane %v149, 1
  %v151 = vadd.f32 %v149, %v150
  %s152 = sld [smem:[#allocation2]]
  %v153 = vstv %s152
  %v154 = vadd.f32 %v151, %v153
  %155 = vst [vmem:[%s5] sm:$0x1] %v154
  // Predicated region
  $region22: #{pde_solver_forward.1} parent=0 // pred_check
    _
  $region23: #{pde_solver_forward.1} parent=0 // pred_check_branch
    %157 = sbr.rel (0) target = $region25
  $region24: #{pde_solver_forward.1} parent=0 // pred_region
    _
  $region25: #{pde_solver_forward.1} parent=0 // pred_fallthru
    _
  // Predicated region
  $region26: #{pde_solver_forward.1} parent=0 // pred_check
    _
  $region27: #{pde_solver_forward.1} parent=0 // pred_check_branch
    %159 = sbr.rel (0) target = $region29
  $region28: #{pde_solver_forward.1} parent=0 // pred_region
    _
  $region29: #{pde_solver_forward.1} parent=0 // pred_fallthru
    _

</llo_original>
